<compile_context>
chip_gen: v5e
topology: v5e:2x2
jax: 0.10.0
libtpu: 0.0.40
codegen_flags: <defaults>
</compile_context>

<pallas_src>
import numpy as np
import jax
import jax.numpy as jnp
from jax.experimental import pallas as pl
from jax.experimental.pallas import tpu as pltpu


# ----------------------------- host-side helpers -----------------------------

def _interp_matrix(in_size: int, scale: int) -> np.ndarray:
    """PyTorch Upsample(mode='linear', align_corners=False) as a dense matrix."""
    out_size = in_size * scale
    A = np.zeros((out_size, in_size), dtype=np.float32)
    for j in range(out_size):
        real = (j + 0.5) * (in_size / out_size) - 0.5
        real = max(real, 0.0)                      # PyTorch clamps to >= 0
        i0 = int(np.floor(real))
        i1 = min(i0 + 1, in_size - 1)
        lam = real - i0
        A[j, i0] += 1.0 - lam
        A[j, i1] += lam
    return A


def _mxu_k_width() -> int:
    """MXU K width for the second (H-upsample) matmul chunking."""
    try:
        kind = jax.devices()[0].device_kind.lower()
    except Exception:
        return 256
    return 256 if ("v6" in kind or "v7" in kind) else 128


def _choose_tile(bd: int, H: int, H2: int, M: int, target_out_bytes: int = 2 << 20) -> int:
    """(b,d) slices per grid step: divides B*D, keeps bf16 blocks sublane aligned,
    prefers an even grid >= 2 (megacore), targets ~2 MiB output blocks so the
    ~0.35us fixed per-step overhead is amortized."""
    def aligned(t):
        in_ok = (t * H) % 16 == 0 or t == bd
        out_ok = (t * H2) % 16 == 0 or t == bd
        return in_ok and out_ok
    divs = [t for t in range(1, bd + 1) if bd % t == 0 and aligned(t)]
    if not divs:
        return bd
    per_slice = H2 * M * 2                         # bf16 output bytes per slice
    def score(t):
        g = bd // t
        return (per_slice * t <= target_out_bytes, g >= 2 and g % 2 == 0, t)
    return max(divs, key=score)


def _choose_chunk(T: int, H: int, mxu_k: int) -> int:
    """Slices per in-kernel mm2 chunk: the block-diag kron(I_CH, Ah) is fixed
    (does not grow with T) and sized so CH*H fills but never exceeds the MXU K
    width (256 on v6e/v7x, 128 on v5e)."""
    cands = [c for c in range(1, T + 1) if T % c == 0 and c * H <= mxu_k]
    if not cands:
        return 1
    good = [c for c in cands if (c * H) % 16 == 0]
    return max(good if good else cands)


def _vmem_limit_bytes(T, CH, H, H2, W, C, M, use_norm):
    """Right-sized VMEM request (double-buffered I/O + weights + intermediates)."""
    in_blk = T * H * (W * C) * 2                   # bf16
    out_blk = T * H2 * M * 2                       # bf16
    weights = (W * C) * M * 2 + (CH * H2) * (CH * H) * 2 + M * 4
    interm = (CH * H * M + CH * H2 * M) * 4
    if use_norm:
        weights += M * M * 4 + 2 * M * 4
        interm += 3 * CH * H2 * M * 4
    total = 2 * (in_blk + out_blk) + weights + interm
    return int(min(32 * 1024 * 1024, max(8 * 1024 * 1024, 2 * total)))


# --------------------------------- kernel ------------------------------------

def _make_kernel(T, CH, H, H2, M, use_norm, eps=1e-5):
    NC = T // CH
    rin, rout = CH * H, CH * H2

    def kernel(x_ref, bmat_ref, ahk_ref, bias_ref, *rest):
        if use_norm:
            p_ref, g_ref, b_ref, o_ref = rest
        else:
            (o_ref,) = rest
        bmat = bmat_ref[...]                       # (W*C, M)      bf16
        ahk = ahk_ref[...]                         # (CH*H2, CH*H) bf16
        bias = bias_ref[...]                       # (1, M)        f32
        if use_norm:
            P = p_ref[...]                         # (M, M)  f32 group-mean projector
            gamma = g_ref[...]                     # (1, M)
            beta = b_ref[...]                      # (1, M)
        # Static chunk loop: keeps mm2's K at the MXU width regardless of T.
        for c in range(NC):
            xc = x_ref[pl.ds(c * rin, rin), :]                                  # (CH*H, W*C)
            # 1x1x1 conv fused with W-axis linear upsample.
            y = jnp.dot(xc, bmat, preferred_element_type=jnp.float32)           # (CH*H, M)
            # H-axis linear upsample via block-diag kron(I_CH, Ah).
            z = jnp.dot(ahk, y.astype(ahk.dtype),
                        preferred_element_type=jnp.float32)                     # (CH*H2, M)
            z = z + bias                            # bias added to the f32 accumulator
            if use_norm:
                # Per-(row, w2) LayerNorm over Cout via group-projector matmuls
                # (two-pass variance; no in-kernel reshape to a lane dim of Cout).
                mu = jnp.dot(z, P, preferred_element_type=jnp.float32)
                d = z - mu
                var = jnp.dot(d * d, P, preferred_element_type=jnp.float32)
                z = d * jax.lax.rsqrt(var + eps) * gamma + beta
            o_ref[pl.ds(c * rout, rout), :] = z.astype(o_ref.dtype)
    return kernel


# -------------------------------- wrapper -------------------------------------

def patch_expansion_v2(x, conv_weight, conv_bias, *, spatial_scale=2,
                       norm_gamma=None, norm_beta=None,
                       channels_last=False, out_dtype=jnp.bfloat16, eps=1e-5):
    """x: (B, C, D, H, W) f32 (PyTorch NCDHW) by default; (B, D, H, W, C) if
    channels_last=True.  Returns (B, Cout, D, H*s, W*s) (or channels-last)."""
    if channels_last:
        B, D, H, W, C = x.shape
    else:
        B, C, D, H, W = x.shape
    Cout = conv_weight.shape[0]
    s = spatial_scale
    H2, W2 = H * s, W * s
    BD = B * D
    M = W2 * Cout                                   # lane-dense output width
    # TODO(synk): if W2*Cout is not a multiple of 128 for a production shape, pad
    # bmat/bias columns to the next 128 multiple (strip in the wrapper) to keep stores lane-dense.

    T = _choose_tile(BD, H, H2, M)
    grid = BD // T
    CH = _choose_chunk(T, H, _mxu_k_width())
    use_norm = norm_gamma is not None

    # ---- host-side parameter prep (glue) ----
    Ah = _interp_matrix(H, s)                       # (H2, H)
    Aw = _interp_matrix(W, s)                       # (W2, W)
    w2d = jnp.asarray(conv_weight, jnp.float32).reshape(Cout, C).T              # (C, Cout)
    # Fused W-upsample + pointwise conv:  bmat[w*C+c, q*Cout+o] = Aw[q,w] * W[o,c]
    bmat = jnp.kron(jnp.asarray(Aw.T), w2d).astype(jnp.bfloat16)                # (W*C, M)
    # Fixed-size block-diagonal H-upsample for one chunk of CH slices.
    ahk = jnp.asarray(np.kron(np.eye(CH, dtype=np.float32), Ah), jnp.bfloat16)  # (CH*H2, CH*H)
    bias = jnp.tile(jnp.asarray(conv_bias, jnp.float32).reshape(1, Cout), (1, W2))  # (1, M)

    if channels_last:
        xl = x.reshape(BD * H, W * C).astype(jnp.bfloat16)
    else:
        xl = jnp.transpose(x, (0, 2, 3, 4, 1)).reshape(BD * H, W * C).astype(jnp.bfloat16)

    kernel = _make_kernel(T, CH, H, H2, M, use_norm, eps)

    in_specs = [
        pl.BlockSpec((T * H, W * C), lambda i: (i, 0)),      # x block (T slices)
        pl.BlockSpec((W * C, M), lambda i: (0, 0)),          # fused conv + W-upsample
        pl.BlockSpec((CH * H2, CH * H), lambda i: (0, 0)),   # block-diag H-upsample (fixed CH)
        pl.BlockSpec((1, M), lambda i: (0, 0)),              # bias (tiled)
    ]
    args = [xl, bmat, ahk, bias]
    if use_norm:
        P = jnp.asarray(np.kron(np.eye(W2, dtype=np.float32),
                                np.full((Cout, Cout), 1.0 / Cout, np.float32)))  # (M, M)
        g = jnp.tile(jnp.asarray(norm_gamma, jnp.float32).reshape(1, Cout), (1, W2))
        b = jnp.tile(jnp.asarray(norm_beta, jnp.float32).reshape(1, Cout), (1, W2))
        in_specs += [pl.BlockSpec((M, M), lambda i: (0, 0)),
                     pl.BlockSpec((1, M), lambda i: (0, 0)),
                     pl.BlockSpec((1, M), lambda i: (0, 0))]
        args += [P, g, b]

    out2d = pl.pallas_call(
        kernel,
        out_shape=jax.ShapeDtypeStruct((BD * H2, M), out_dtype),
        grid_spec=pltpu.PrefetchScalarGridSpec(
            num_scalar_prefetch=0,
            grid=(grid,),
            in_specs=in_specs,
            out_specs=pl.BlockSpec((T * H2, M), lambda i: (i, 0)),
        ),
        compiler_params=pltpu.CompilerParams(
            dimension_semantics=("parallel",),
            vmem_limit_bytes=_vmem_limit_bytes(T, CH, H, H2, W, C, M, use_norm),
        ),
    )(*args)

    if channels_last:
        return out2d.reshape(B, D, H2, W2, Cout)
    return jnp.transpose(out2d.reshape(B, D, H2, W2, Cout), (0, 4, 1, 2, 3))


# ----------------------- pure-JAX references (f32) -----------------------

def _apply_ln_ncdhw(y, gamma, beta, eps=1e-5):
    yl = jnp.transpose(y, (0, 2, 3, 4, 1))
    mu = jnp.mean(yl, -1, keepdims=True)
    var = jnp.mean((yl - mu) ** 2, -1, keepdims=True)
    yl = (yl - mu) * jax.lax.rsqrt(var + eps) * gamma + beta
    return jnp.transpose(yl, (0, 4, 1, 2, 3))


def _reference(x, conv_weight, conv_bias, spatial_scale=2, gamma=None, beta=None, eps=1e-5):
    B, C, D, H, W = x.shape
    Cout = conv_weight.shape[0]
    s = spatial_scale
    Ah = jnp.asarray(_interp_matrix(H, s))
    Aw = jnp.asarray(_interp_matrix(W, s))
    xu = jnp.einsum('ph,bcdhw->bcdpw', Ah, x)
    xu = jnp.einsum('qw,bcdpw->bcdpq', Aw, xu)
    w2d = jnp.asarray(conv_weight, jnp.float32).reshape(Cout, C)
    y = jnp.einsum('oc,bcdpq->bodpq', w2d, xu) + conv_bias.reshape(1, Cout, 1, 1, 1)
    if gamma is not None:
        y = _apply_ln_ncdhw(y, gamma, beta, eps)
    return y


if __name__ == "__main__":
    key = jax.random.PRNGKey(0)
    k1, k2, k3, k4, k5 = jax.random.split(key, 5)

    B, C, D, H, W = 2, 4, 3, 16, 16
    Cout, scale = 8, 2

    x = jax.random.normal(k1, (B, C, D, H, W), dtype=jnp.float32)
    conv_weight = 0.1 * jax.random.normal(k2, (Cout, C, 1, 1, 1), dtype=jnp.float32)
    conv_bias = 0.2 * jax.random.normal(k3, (Cout,), dtype=jnp.float32)

    # ---- linear path (module default: norm=None); kernel emits bf16 ----
    out = patch_expansion_v2(x, conv_weight, conv_bias, spatial_scale=scale)
    out = jax.block_until_ready(out)
    assert out.shape == (B, Cout, D, H * scale, W * scale), out.shape
    assert out.dtype == jnp.bfloat16, out.dtype

    ref = jax.block_until_ready(_reference(x, conv_weight, conv_bias, scale))
    # bf16 MXU inputs + bf16 output storage (f32 accumulation) vs f32 reference.
    np.testing.assert_allclose(np.asarray(out.astype(jnp.float32)), np.asarray(ref),
                               rtol=2e-2, atol=2e-2)

    # ---- channels-last fast path (skips wrapper NCDHW transposes) must agree exactly ----
    x_cl = jnp.transpose(x, (0, 2, 3, 4, 1))
    out_cl = jax.block_until_ready(
        patch_expansion_v2(x_cl, conv_weight, conv_bias, spatial_scale=scale,
                           channels_last=True))
    np.testing.assert_array_equal(
        np.asarray(out_cl.astype(jnp.float32)),
        np.asarray(jnp.transpose(out, (0, 2, 3, 4, 1)).astype(jnp.float32)))

    # ---- optional LayerNorm path, validated end-to-end against the f32 reference ----
    gamma = 1.0 + 0.1 * jax.random.normal(k4, (Cout,), dtype=jnp.float32)
    beta = 0.05 * jax.random.normal(k5, (Cout,), dtype=jnp.float32)
    out_n = jax.block_until_ready(
        patch_expansion_v2(x, conv_weight, conv_bias, spatial_scale=scale,
                           norm_gamma=gamma, norm_beta=beta))
    assert out_n.shape == out.shape
    ref_n = jax.block_until_ready(
        _reference(x, conv_weight, conv_bias, scale, gamma, beta))
    # LayerNorm's 1/std amplifies the bf16 matmul/storage rounding -> looser tolerance.
    np.testing.assert_allclose(np.asarray(out_n.astype(jnp.float32)), np.asarray(ref_n),
                               rtol=4e-2, atol=4e-2)

    print("KERNEL_OK")
</pallas_src>

<mosaic_0001>
module attributes {stable_mosaic.version = 11 : i64} {
  func.func @kernel(%arg0: i32, %arg1: memref<48x64xbf16, #tpu.memory_space<vmem>>, %arg2: memref<64x256xbf16, #tpu.memory_space<vmem>>, %arg3: memref<96x48xbf16, #tpu.memory_space<vmem>>, %arg4: memref<1x256xf32, #tpu.memory_space<vmem>>, %arg5: memref<96x256xbf16, #tpu.memory_space<vmem>>) attributes {dimension_semantics = [#tpu.dimension_semantics<parallel>], iteration_bounds = array<i64: 2>, scalar_prefetch = 0 : i64, scratch_operands = 0 : i64, tpu.core_type = #tpu.core_type<tc>, window_params = [{transform_indices = @transform_0, window_bounds = array<i64: 48, 64>}, {pipeline_mode = #tpu.pipeline_mode<synchronous>, transform_indices = @transform_1, window_bounds = array<i64: 64, 256>}, {pipeline_mode = #tpu.pipeline_mode<synchronous>, transform_indices = @transform_2, window_bounds = array<i64: 96, 48>}, {pipeline_mode = #tpu.pipeline_mode<synchronous>, transform_indices = @transform_3, window_bounds = array<i64: 1, 256>}, {transform_indices = @transform_4, window_bounds = array<i64: 96, 256>}]} {
    %c0 = arith.constant 0 : index
    %c0_0 = arith.constant 0 : index
    %0 = vector.load %arg2[%c0, %c0_0] : memref<64x256xbf16, #tpu.memory_space<vmem>>, vector<64x256xbf16>
    %c0_1 = arith.constant 0 : index
    %c0_2 = arith.constant 0 : index
    %1 = vector.load %arg3[%c0_1, %c0_2] : memref<96x48xbf16, #tpu.memory_space<vmem>>, vector<96x48xbf16>
    %c0_3 = arith.constant 0 : index
    %c0_4 = arith.constant 0 : index
    %2 = vector.load %arg4[%c0_3, %c0_4] : memref<1x256xf32, #tpu.memory_space<vmem>>, vector<1x256xf32>
    %c0_5 = arith.constant 0 : index
    %c0_6 = arith.constant 0 : index
    %3 = vector.load %arg1[%c0_5, %c0_6] : memref<48x64xbf16, #tpu.memory_space<vmem>>, vector<48x64xbf16>
    %cst = arith.constant dense<0.000000e+00> : vector<48x256xf32>
    %4 = tpu.matmul %3, %0, %cst {dimension_numbers = #tpu.dot_dimension_numbers<[1], [0], [0], [1], [0, 0, 1, 1], [], []>} : vector<48x64xbf16>, vector<64x256xbf16>, vector<48x256xf32> -> vector<48x256xf32>
    %5 = arith.truncf %4 : vector<48x256xf32> to vector<48x256xbf16>
    %cst_7 = arith.constant dense<0.000000e+00> : vector<96x256xf32>
    %6 = tpu.matmul %1, %5, %cst_7 {dimension_numbers = #tpu.dot_dimension_numbers<[1], [0], [0], [1], [0, 0, 1, 1], [], []>} : vector<96x48xbf16>, vector<48x256xbf16>, vector<96x256xf32> -> vector<96x256xf32>
    %7 = vector.broadcast %2 : vector<1x256xf32> to vector<96x256xf32>
    %8 = arith.addf %6, %7 : vector<96x256xf32>
    %9 = arith.truncf %8 : vector<96x256xf32> to vector<96x256xbf16>
    %c0_8 = arith.constant 0 : index
    %c0_9 = arith.constant 0 : index
    %10 = vector.load %arg5[%c0_8, %c0_9] : memref<96x256xbf16, #tpu.memory_space<vmem>>, vector<96x256xbf16>
    tpu.vector_store %arg5[%c0_8, %c0_9], %9 {strides = array<i32>} : memref<96x256xbf16, #tpu.memory_space<vmem>>, vector<96x256xbf16>,
    return
  }
  func.func @transform_0(%arg0: i32) -> (i32, i32) {
    %c0_i32 = arith.constant 0 : i32
    %c0_i32_0 = arith.constant 0 : i32
    return %arg0, %c0_i32 : i32, i32
  }
  func.func @transform_1(%arg0: i32) -> (i32, i32) {
    %c0_i32 = arith.constant 0 : i32
    %c0_i32_0 = arith.constant 0 : i32
    %c0_i32_1 = arith.constant 0 : i32
    return %c0_i32, %c0_i32_0 : i32, i32
  }
  func.func @transform_2(%arg0: i32) -> (i32, i32) {
    %c0_i32 = arith.constant 0 : i32
    %c0_i32_0 = arith.constant 0 : i32
    %c0_i32_1 = arith.constant 0 : i32
    return %c0_i32, %c0_i32_0 : i32, i32
  }
  func.func @transform_3(%arg0: i32) -> (i32, i32) {
    %c0_i32 = arith.constant 0 : i32
    %c0_i32_0 = arith.constant 0 : i32
    %c0_i32_1 = arith.constant 0 : i32
    return %c0_i32, %c0_i32_0 : i32, i32
  }
  func.func @transform_4(%arg0: i32) -> (i32, i32) {
    %c0_i32 = arith.constant 0 : i32
    %c0_i32_0 = arith.constant 0 : i32
    return %arg0, %c0_i32 : i32, i32
  }
}

</mosaic_0001>

<llo_original>
// kernel: tpu_custom_call.1
$region0: #{tpu_custom_call.1}
  #allocation0 [shape = 'u32[]', space=smem, size = 0x4, offset = 0x4, fixed_abs, tag = 'smem constant byte address 0x4 - core index']
  #allocation1 [shape = 'u32[72,128]{1,0:T(1,128)}', space=vmem, size = 0x9000, scoped, tag = 'internal scratch']
  %s0 = inlined_call_operand.vmem [shape: bf16[96,64], index: 0, kind: input, shape index: {}]
  %s1 = inlined_call_operand.vmem [shape: bf16[64,256], index: 1, kind: input, shape index: {}]
  %s2 = inlined_call_operand.vmem [shape: bf16[96,48], index: 2, kind: input, shape index: {}]
  %s3 = inlined_call_operand.vmem [shape: f32[1,256], index: 3, kind: input, shape index: {}]
  %s4 = inlined_call_operand.hbm [shape: bf16[192,256], index: 4, kind: output, shape index: {}]
  %s5 = sld [smem:[#allocation0]]
  $region49: #{tpu_custom_call.1} parent=0
    _
  %s7 = ssub.s32 1, %s5
  %s8 = scalar_select 0, %s7, %s5
  $region1: #{tpu_custom_call.1} parent=0
    #allocation2 [shape = 'u8[98304]{0}', space=vmem, size = 0x18000, scoped, tag = 'output window, operand 0']
    #allocation3 [shape = 's32[2]{0}', space=sflag, size = 0x8, scoped, tag = 'scoped memory for tpu_custom_call.1']
    %9 = vsyncpa [#allocation3], 0
    %s10 = scalar_lea.sflag [#allocation3], 1
    %11 = vsyncpa %s10, 0
    loop: start=0, step=1, limit=4
    $region2: #{tpu_custom_call.1} parent=1 // loop_pre_header
      _
    $region3: #{tpu_custom_call.1} parent=1 // loop_header
      %s13 = sphi 0, %s17
      %p14 = scmp.ge.s32.totalorder %s13, 4
      %s23 = sphi 0, %s25
      %s26 = sphi 0, %s23
      %s27 = sphi 0, %s26
      %s43 = sphi 0, %s27
      %s47 = sphi 0, %s47
      %s49 = sphi 0, %s47
      %s50 = sphi 0, %s49
      %s64 = sphi 0, %s50
      %s68 = sphi 0, %s68
      %s70 = sphi 0, %s68
      %s71 = sphi 0, %s70
      %s85 = sphi 0, %s71
      %s89 = sphi 0, %s89
      %s91 = sphi 0, %s89
      %s92 = sphi 0, %s91
      %s106 = sphi 0, %s92
      %s112 = sphi 0, %s114
      %s115 = sphi 0, %s112
      %s116 = sphi 0, %s115
      %s132 = sphi 0, %s116
    $region4: #{tpu_custom_call.1} parent=1 // loop_header_branch
      %16 = sbr.rel (%p14) target = $region8
    $region5: #{tpu_custom_call.1} parent=1 // loop_body
      %s18 = ssub.s32 %s13, 1
      %s19 = ssub.s32 %s13, 2
      %s20 = sadd.s32 %s13, 1
      %s21 = ssub.s32 %s13, %s20
      %p22 = scmp.eq.s32.totalorder %s21, 0
      %s24 = sadd.s32 %s23, 1
      %s25 = scalar_select %p22, %s23, %s24
      %p28 = pneg %p22
      %p29 = scmp.eq.s32.totalorder %s13, 1
      %p30 = por %p28, %p29
      %p31 = scmp.ne.s32.totalorder %s23, %s26
      %p32 = scmp.eq.s32.totalorder %s13, 0
      %p33 = por %p31, %p32
      %p34 = scmp.ne.s32.totalorder %s23, %s26
      %p35 = scmp.eq.s32.totalorder %s18, 1
      %p36 = por %p34, %p35
      %p37 = scmp.ne.s32.totalorder %s26, %s27
      %p38 = scmp.eq.s32.totalorder %s18, 0
      %p39 = por %p37, %p38
      %p40 = scmp.ne.s32.totalorder %s26, %s27
      %p41 = scmp.eq.s32.totalorder %s19, 1
      %p42 = por %p40, %p41
      %p44 = scmp.ne.s32.totalorder %s27, %s43
      %p45 = scmp.eq.s32.totalorder %s19, 0
      %p46 = por %p44, %p45
      %s48 = sadd.s32 %s47, 1
      %p51 = scmp.eq.s32.totalorder %s13, 1
      %p52 = scmp.ne.s32.totalorder %s47, %s49
      %p53 = scmp.eq.s32.totalorder %s13, 0
      %p54 = por %p52, %p53
      %p55 = scmp.ne.s32.totalorder %s47, %s49
      %p56 = scmp.eq.s32.totalorder %s18, 1
      %p57 = por %p55, %p56
      %p58 = scmp.ne.s32.totalorder %s49, %s50
      %p59 = scmp.eq.s32.totalorder %s18, 0
      %p60 = por %p58, %p59
      %p61 = scmp.ne.s32.totalorder %s49, %s50
      %p62 = scmp.eq.s32.totalorder %s19, 1
      %p63 = por %p61, %p62
      %p65 = scmp.ne.s32.totalorder %s50, %s64
      %p66 = scmp.eq.s32.totalorder %s19, 0
      %p67 = por %p65, %p66
      %s69 = sadd.s32 %s68, 1
      %p72 = scmp.eq.s32.totalorder %s13, 1
      %p73 = scmp.ne.s32.totalorder %s68, %s70
      %p74 = scmp.eq.s32.totalorder %s13, 0
      %p75 = por %p73, %p74
      %p76 = scmp.ne.s32.totalorder %s68, %s70
      %p77 = scmp.eq.s32.totalorder %s18, 1
      %p78 = por %p76, %p77
      %p79 = scmp.ne.s32.totalorder %s70, %s71
      %p80 = scmp.eq.s32.totalorder %s18, 0
      %p81 = por %p79, %p80
      %p82 = scmp.ne.s32.totalorder %s70, %s71
      %p83 = scmp.eq.s32.totalorder %s19, 1
      %p84 = por %p82, %p83
      %p86 = scmp.ne.s32.totalorder %s71, %s85
      %p87 = scmp.eq.s32.totalorder %s19, 0
      %p88 = por %p86, %p87
      %s90 = sadd.s32 %s89, 1
      %p93 = scmp.eq.s32.totalorder %s13, 1
      %p94 = scmp.ne.s32.totalorder %s89, %s91
      %p95 = scmp.eq.s32.totalorder %s13, 0
      %p96 = por %p94, %p95
      %p97 = scmp.ne.s32.totalorder %s89, %s91
      %p98 = scmp.eq.s32.totalorder %s18, 1
      %p99 = por %p97, %p98
      %p100 = scmp.ne.s32.totalorder %s91, %s92
      %p101 = scmp.eq.s32.totalorder %s18, 0
      %p102 = por %p100, %p101
      %p103 = scmp.ne.s32.totalorder %s91, %s92
      %p104 = scmp.eq.s32.totalorder %s19, 1
      %p105 = por %p103, %p104
      %p107 = scmp.ne.s32.totalorder %s92, %s106
      %p108 = scmp.eq.s32.totalorder %s19, 0
      %p109 = por %p107, %p108
      %s110 = ssub.s32 %s13, %s20
      %p111 = scmp.eq.s32.totalorder %s110, 0
      %s113 = sadd.s32 %s112, 1
      %s114 = scalar_select %p111, %s112, %s113
      %p117 = pneg %p111
      %p118 = scmp.eq.s32.totalorder %s13, 1
      %p119 = por %p117, %p118
      %p120 = scmp.ne.s32.totalorder %s112, %s115
      %p121 = scmp.eq.s32.totalorder %s13, 0
      %p122 = por %p120, %p121
      %p123 = scmp.ne.s32.totalorder %s112, %s115
      %p124 = scmp.eq.s32.totalorder %s18, 1
      %p125 = por %p123, %p124
      %p126 = scmp.ne.s32.totalorder %s115, %s116
      %p127 = scmp.eq.s32.totalorder %s18, 0
      %p128 = por %p126, %p127
      %p129 = scmp.ne.s32.totalorder %s115, %s116
      %p130 = scmp.eq.s32.totalorder %s19, 1
      %p131 = por %p129, %p130
      %p133 = scmp.ne.s32.totalorder %s116, %s132
      %p134 = scmp.eq.s32.totalorder %s19, 0
      %p135 = por %p133, %p134
      %p136 = scmp.le.s32.totalorder 1, %s13
      %p137 = scmp.lt.s32.totalorder %s13, 3
      %p138 = pnand %p136, %p137
      %p139 = pneg %p138
      // Predicated region
      $region9: #{tpu_custom_call.1} parent=5 // pred_check
        _
      $region10: #{tpu_custom_call.1} parent=5 // pred_check_branch
        %141 = sbr.rel (%p138) target = $region12
      $region11: #{tpu_custom_call.1} parent=5 // pred_region
        %s142 = ssub.s32 %s13, 1
        // Predicated region
        $region13: #{tpu_custom_call.1} parent=11 // pred_check
          %p143 = pneg %p60
        $region14: #{tpu_custom_call.1} parent=11 // pred_check_branch
          %145 = sbr.rel (%p143) target = $region16
        $region15: #{tpu_custom_call.1} parent=11 // pred_region
          _
        $region16: #{tpu_custom_call.1} parent=11 // pred_fallthru
          _
        // Predicated region
        $region17: #{tpu_custom_call.1} parent=11 // pred_check
          %p146 = pneg %p81
        $region18: #{tpu_custom_call.1} parent=11 // pred_check_branch
          %148 = sbr.rel (%p146) target = $region20
        $region19: #{tpu_custom_call.1} parent=11 // pred_region
          _
        $region20: #{tpu_custom_call.1} parent=11 // pred_fallthru
          _
        // Predicated region
        $region21: #{tpu_custom_call.1} parent=11 // pred_check
          %p149 = pneg %p102
        $region22: #{tpu_custom_call.1} parent=11 // pred_check_branch
          %151 = sbr.rel (%p149) target = $region24
        $region23: #{tpu_custom_call.1} parent=11 // pred_region
          _
        $region24: #{tpu_custom_call.1} parent=11 // pred_fallthru
          _
      $region12: #{tpu_custom_call.1} parent=5 // pred_fallthru
        _
      %p152 = scmp.lt.s32.totalorder %s13, 2
      // Predicated region
      $region25: #{tpu_custom_call.1} parent=5 // pred_check
        %p153 = pneg %p152
      $region26: #{tpu_custom_call.1} parent=5 // pred_check_branch
        %155 = sbr.rel (%p153) target = $region28
      $region27: #{tpu_custom_call.1} parent=5 // pred_region
        // Predicated region
        $region29: #{tpu_custom_call.1} parent=27 // pred_check
          %p156 = pneg %p33
        $region30: #{tpu_custom_call.1} parent=27 // pred_check_branch
          %158 = sbr.rel (%p156) target = $region32
        $region31: #{tpu_custom_call.1} parent=27 // pred_region
          %s159 = smul.u32 6, %s13
          %p160 = scmp.lt.s32.totalorder %s159, 11
          %s161 = scalar_select %p160, %s159, 11
          %s162 = smul.addr %s161, 4
          %s163 = scalar_lea.vmem %s0, %s162
          %s164 = smul.u32 6, %s13
        $region32: #{tpu_custom_call.1} parent=27 // pred_fallthru
          _
      $region28: #{tpu_custom_call.1} parent=5 // pred_fallthru
        _
      %p165 = scmp.le.s32.totalorder 1, %s13
      %p166 = scmp.lt.s32.totalorder %s13, 3
      %p167 = pnand %p165, %p166
      %p168 = pneg %p167
      // Predicated region
      $region33: #{tpu_custom_call.1} parent=5 // pred_check
        _
      $region34: #{tpu_custom_call.1} parent=5 // pred_check_branch
        %170 = sbr.rel (%p167) target = $region36
      $region35: #{tpu_custom_call.1} parent=5 // pred_region
        %s171 = ssub.s32 %s13, 1
        %s172 = smul.u32 6, %s18
        %p173 = scmp.lt.s32.totalorder %s172, 11
        %s174 = scalar_select %p173, %s172, 11
        %s175 = smul.addr %s174, 4
        %s176 = scalar_lea.vmem %s0, %s175
        %p177 = pneg %p39
        %p178 = pneg %p36
        %p179 = pneg %p60
        %p180 = pneg %p57
        %p181 = pneg %p81
        %p182 = pneg %p78
        %p183 = pneg %p102
        %p184 = pneg %p99
        %p185 = pneg %p128
        %p186 = pneg %p125
        %s187 = sand.u32 %s115, 1
        %s188 = scalar_lea.sflag [#allocation3], %s187
        %s189 = sand.u32 %s115, 1
        %s190 = smul.addr %s189, 96
        %s191 = scalar_lea.vmem [#allocation2], %s190
        %s192 = smul.u32 6, %s18
        %p193 = scmp.lt.s32.totalorder %s192, 11
        %s194 = scalar_select %p193, %s192, 11
        %s195 = smul.addr %s194, 4
        %s196 = scalar_lea.vmem %s0, %s195
        %s197 = smul.u32 6, %s18
        %s198 = smul.u32 12, %s18
        %v200 = vld [vmem:[%s1] sm:$0xff]
        %v201 = vld [vmem:[%s1 + $0x8] sm:$0xff]
        %v202 = vld [vmem:[%s1 + $0x10] sm:$0xff]
        %v203 = vld [vmem:[%s1 + $0x18] sm:$0xff]
        %v204 = vld [vmem:[%s1 + $0x20] sm:$0xff]
        %v205 = vld [vmem:[%s1 + $0x28] sm:$0xff]
        %v206 = vld [vmem:[%s1 + $0x30] sm:$0xff]
        %v207 = vld [vmem:[%s1 + $0x38] sm:$0xff]
        %v208 = vld [vmem:[%s2] sm:$0xf]
        %v209 = vld [vmem:[%s2 + $0x4] sm:$0xf]
        %v210 = vld [vmem:[%s2 + $0x8] sm:$0xf]
        %v211 = vld [vmem:[%s2 + $0xc] sm:$0xf]
        %v212 = vld [vmem:[%s2 + $0x10] sm:$0xf]
        %v213 = vld [vmem:[%s2 + $0x14] sm:$0xf]
        %v214 = vld [vmem:[%s2 + $0x18] sm:$0xf]
        %v215 = vld [vmem:[%s2 + $0x1c] sm:$0xf]
        %v216 = vld [vmem:[%s2 + $0x20] sm:$0xf]
        %v217 = vld [vmem:[%s2 + $0x24] sm:$0xf]
        %v218 = vld [vmem:[%s2 + $0x28] sm:$0xf]
        %v219 = vld [vmem:[%s2 + $0x2c] sm:$0xf]
        %v220 = vld [vmem:[%s3] sm:$0x3]
        %v221 = vld [vmem:[%s196] sm:$0xf]
        %v222 = vld [vmem:[%s196 + $0x4] sm:$0xf]
        %v223 = vld [vmem:[%s196 + $0x8] sm:$0xf]
        %v224 = vld [vmem:[%s196 + $0xc] sm:$0xf]
        %v225 = vld [vmem:[%s196 + $0x10] sm:$0xf]
        %v226 = vld [vmem:[%s196 + $0x14] sm:$0xf]
        %v233 = vunpack.c.l.b16 %v221
        %v234 = vunpack.c.l.b16 %v222
        %v235 = vunpack.c.l.b16 %v223
        %v236 = vunpack.c.l.b16 %v224
        %v237 = vunpack.c.l.b16 %v225
        %v238 = vunpack.c.l.b16 %v226
        %v239 = vpack.c.b16 %v234, %v233
        %v240 = vpack.c.b16 %v236, %v235
        %v241 = vpack.c.b16 %v238, %v237
        %v250 = vunpack.c.l.b16 %v200
        %v251 = vunpack.c.h.b16 %v200
        %v252 = vunpack.c.l.b16 %v201
        %v253 = vunpack.c.h.b16 %v201
        %v254 = vunpack.c.l.b16 %v202
        %v255 = vunpack.c.h.b16 %v202
        %v256 = vunpack.c.l.b16 %v203
        %v257 = vunpack.c.h.b16 %v203
        %v258 = vunpack.c.l.b16 %v204
        %v259 = vunpack.c.h.b16 %v204
        %v260 = vunpack.c.l.b16 %v205
        %v261 = vunpack.c.h.b16 %v205
        %v262 = vunpack.c.l.b16 %v206
        %v263 = vunpack.c.h.b16 %v206
        %v264 = vunpack.c.l.b16 %v207
        %v265 = vunpack.c.h.b16 %v207
        %v266 = vpack.c.b16 %v252, %v250
        %v267 = vpack.c.b16 %v253, %v251
        %v268 = vpack.c.b16 %v256, %v254
        %v269 = vpack.c.b16 %v257, %v255
        %v270 = vpack.c.b16 %v260, %v258
        %v271 = vpack.c.b16 %v261, %v259
        %v272 = vpack.c.b16 %v264, %v262
        %v273 = vpack.c.b16 %v265, %v263
        %vm282 = vcmask 523264
        %v284 = vsel %vm282, %v239, 0
        %v287 = vsel %vm282, %v240, 0
        %v290 = vsel %vm282, %v241, 0
        %292 = vmatpush.bf16.msra.mxu0 0
        %293 = vmatpush.bf16.msra.mxu0 0
        %294 = vmatpush.bf16.msra.mxu0 0
        %295 = vmatpush.bf16.msra.mxu0 0
        %296 = vmatpush.bf16.msra.mxu0 %v272
        %297 = vmatpush.bf16.msra.mxu0 %v270
        %298 = vmatpush.bf16.msra.mxu0 %v268
        %299 = vmatpush.bf16.msra.mxu0 %v266
        %300 = vmatmul.bf16.gmra.mxu0 %v284
        %v301 = vpop.f32.mrf.mxu0
        %v302 = vadd.f32 0.0, %v301
        %v303 = vpop.f32.mrf.mxu0
        %v304 = vadd.f32 0.0, %v303
        %305 = vmatmul.bf16.gmra.mxu0 %v287
        %v306 = vpop.f32.mrf.mxu0
        %v307 = vadd.f32 0.0, %v306
        %v308 = vpop.f32.mrf.mxu0
        %v309 = vadd.f32 0.0, %v308
        %310 = vmatmul.bf16.gmra.mxu0 %v290
        %v311 = vpop.f32.mrf.mxu0
        %v312 = vadd.f32 0.0, %v311
        %v313 = vpop.f32.mrf.mxu0
        %v314 = vadd.f32 0.0, %v313
        %315 = vdwg.mxu0
        %316 = vmatpush.bf16.msra.mxu0 0
        %317 = vmatpush.bf16.msra.mxu0 0
        %318 = vmatpush.bf16.msra.mxu0 0
        %319 = vmatpush.bf16.msra.mxu0 0
        %320 = vmatpush.bf16.msra.mxu0 %v273
        %321 = vmatpush.bf16.msra.mxu0 %v271
        %322 = vmatpush.bf16.msra.mxu0 %v269
        %323 = vmatpush.bf16.msra.mxu0 %v267
        %324 = vmatmul.bf16.gmra.mxu0 %v284
        %v325 = vpop.f32.mrf.mxu0
        %v326 = vadd.f32 0.0, %v325
        %v327 = vpop.f32.mrf.mxu0
        %v328 = vadd.f32 0.0, %v327
        %329 = vmatmul.bf16.gmra.mxu0 %v287
        %v330 = vpop.f32.mrf.mxu0
        %v331 = vadd.f32 0.0, %v330
        %v332 = vpop.f32.mrf.mxu0
        %v333 = vadd.f32 0.0, %v332
        %334 = vmatmul.bf16.gmra.mxu0 %v290
        %v335 = vpop.f32.mrf.mxu0
        %v336 = vadd.f32 0.0, %v335
        %v337 = vpop.f32.mrf.mxu0
        %v338 = vadd.f32 0.0, %v337
        %339 = vdwg.mxu0
        %v340 = vpack.c.bf16 %v304, %v302
        %v341 = vpack.c.bf16 %v328, %v326
        %v342 = vpack.c.bf16 %v309, %v307
        %v343 = vpack.c.bf16 %v333, %v331
        %v344 = vpack.c.bf16 %v314, %v312
        %v345 = vpack.c.bf16 %v338, %v336
        %v347 = vperm.slane %v220, 0
        %v348 = vperm.slane %v220, 1
        %v363 = vunpack.c.l.b16 %v208
        %v364 = vunpack.c.l.b16 %v209
        %v365 = vunpack.c.l.b16 %v210
        %v366 = vunpack.c.l.b16 %v211
        %v367 = vunpack.c.l.b16 %v212
        %v368 = vunpack.c.l.b16 %v213
        %v369 = vunpack.c.l.b16 %v214
        %v370 = vunpack.c.l.b16 %v215
        %v371 = vunpack.c.l.b16 %v216
        %v372 = vunpack.c.l.b16 %v217
        %v373 = vunpack.c.l.b16 %v218
        %v374 = vunpack.c.l.b16 %v219
        %v375 = vpack.c.b16 %v364, %v363
        %v376 = vpack.c.b16 %v366, %v365
        %v377 = vpack.c.b16 %v368, %v367
        %v378 = vpack.c.b16 %v370, %v369
        %v379 = vpack.c.b16 %v372, %v371
        %v380 = vpack.c.b16 %v374, %v373
        %vm381 = vcmask 392192
        %v383 = vsel %vm381, %v375, 0
        %v386 = vsel %vm381, %v376, 0
        %v389 = vsel %vm381, %v377, 0
        %v392 = vsel %vm381, %v378, 0
        %v395 = vsel %vm381, %v379, 0
        %v398 = vsel %vm381, %v380, 0
        %400 = vmatpush.bf16.msra.mxu0 0
        %401 = vmatpush.bf16.msra.mxu0 0
        %402 = vmatpush.bf16.msra.mxu0 0
        %403 = vmatpush.bf16.msra.mxu0 0
        %404 = vmatpush.bf16.msra.mxu0 0
        %405 = vmatpush.bf16.msra.mxu0 %v344
        %406 = vmatpush.bf16.msra.mxu0 %v342
        %407 = vmatpush.bf16.msra.mxu0 %v340
        %408 = vmatmul.bf16.gmra.mxu0 %v383
        %v409 = vpop.f32.mrf.mxu0
        %v410 = vadd.f32 %v347, %v409
        %v411 = vpop.f32.mrf.mxu0
        %v412 = vadd.f32 %v347, %v411
        %413 = vmatmul.bf16.gmra.mxu0 %v386
        %v414 = vpop.f32.mrf.mxu0
        %v415 = vadd.f32 %v347, %v414
        %v416 = vpop.f32.mrf.mxu0
        %v417 = vadd.f32 %v347, %v416
        %418 = vmatmul.bf16.gmra.mxu0 %v389
        %v419 = vpop.f32.mrf.mxu0
        %v420 = vadd.f32 %v347, %v419
        %v421 = vpop.f32.mrf.mxu0
        %v422 = vadd.f32 %v347, %v421
        %423 = vmatmul.bf16.gmra.mxu0 %v392
        %v424 = vpop.f32.mrf.mxu0
        %v425 = vadd.f32 %v347, %v424
        %v426 = vpop.f32.mrf.mxu0
        %v427 = vadd.f32 %v347, %v426
        %428 = vmatmul.bf16.gmra.mxu0 %v395
        %v429 = vpop.f32.mrf.mxu0
        %v430 = vadd.f32 %v347, %v429
        %v431 = vpop.f32.mrf.mxu0
        %v432 = vadd.f32 %v347, %v431
        %433 = vmatmul.bf16.gmra.mxu0 %v398
        %v434 = vpop.f32.mrf.mxu0
        %v435 = vadd.f32 %v347, %v434
        %v436 = vpop.f32.mrf.mxu0
        %v437 = vadd.f32 %v347, %v436
        %438 = vdwg.mxu0
        %439 = vmatpush.bf16.msra.mxu0 0
        %440 = vmatpush.bf16.msra.mxu0 0
        %441 = vmatpush.bf16.msra.mxu0 0
        %442 = vmatpush.bf16.msra.mxu0 0
        %443 = vmatpush.bf16.msra.mxu0 0
        %444 = vmatpush.bf16.msra.mxu0 %v345
        %445 = vmatpush.bf16.msra.mxu0 %v343
        %446 = vmatpush.bf16.msra.mxu0 %v341
        %447 = vmatmul.bf16.gmra.mxu0 %v383
        %v448 = vpop.f32.mrf.mxu0
        %v449 = vadd.f32 %v348, %v448
        %v450 = vpop.f32.mrf.mxu0
        %v451 = vadd.f32 %v348, %v450
        %452 = vmatmul.bf16.gmra.mxu0 %v386
        %v453 = vpop.f32.mrf.mxu0
        %v454 = vadd.f32 %v348, %v453
        %v455 = vpop.f32.mrf.mxu0
        %v456 = vadd.f32 %v348, %v455
        %457 = vmatmul.bf16.gmra.mxu0 %v389
        %v458 = vpop.f32.mrf.mxu0
        %v459 = vadd.f32 %v348, %v458
        %v460 = vpop.f32.mrf.mxu0
        %v461 = vadd.f32 %v348, %v460
        %462 = vmatmul.bf16.gmra.mxu0 %v392
        %v463 = vpop.f32.mrf.mxu0
        %v464 = vadd.f32 %v348, %v463
        %v465 = vpop.f32.mrf.mxu0
        %v466 = vadd.f32 %v348, %v465
        %467 = vmatmul.bf16.gmra.mxu0 %v395
        %v468 = vpop.f32.mrf.mxu0
        %v469 = vadd.f32 %v348, %v468
        %v470 = vpop.f32.mrf.mxu0
        %v471 = vadd.f32 %v348, %v470
        %472 = vmatmul.bf16.gmra.mxu0 %v398
        %v473 = vpop.f32.mrf.mxu0
        %v474 = vadd.f32 %v348, %v473
        %v475 = vpop.f32.mrf.mxu0
        %v476 = vadd.f32 %v348, %v475
        %477 = vdwg.mxu0
        %v478 = vpack.c.bf16 %v449, %v410
        %v479 = vpack.c.bf16 %v451, %v412
        %v480 = vpack.c.bf16 %v454, %v415
        %v481 = vpack.c.bf16 %v456, %v417
        %v482 = vpack.c.bf16 %v459, %v420
        %v483 = vpack.c.bf16 %v461, %v422
        %v484 = vpack.c.bf16 %v464, %v425
        %v485 = vpack.c.bf16 %v466, %v427
        %v486 = vpack.c.bf16 %v469, %v430
        %v487 = vpack.c.bf16 %v471, %v432
        %v488 = vpack.c.bf16 %v474, %v435
        %v489 = vpack.c.bf16 %v476, %v437
        %490 = vst [vmem:[%s191] sm:$0xff] %v478
        %491 = vst [vmem:[%s191 + $0x8] sm:$0xff] %v479
        %492 = vst [vmem:[%s191 + $0x10] sm:$0xff] %v480
        %493 = vst [vmem:[%s191 + $0x18] sm:$0xff] %v481
        %494 = vst [vmem:[%s191 + $0x20] sm:$0xff] %v482
        %495 = vst [vmem:[%s191 + $0x28] sm:$0xff] %v483
        %496 = vst [vmem:[%s191 + $0x30] sm:$0xff] %v484
        %497 = vst [vmem:[%s191 + $0x38] sm:$0xff] %v485
        %498 = vst [vmem:[%s191 + $0x40] sm:$0xff] %v486
        %499 = vst [vmem:[%s191 + $0x48] sm:$0xff] %v487
        %500 = vst [vmem:[%s191 + $0x50] sm:$0xff] %v488
        %501 = vst [vmem:[%s191 + $0x58] sm:$0xff] %v489
        %s502 = sand.u32 %s115, 1
        %s503 = scalar_lea.sflag [#allocation3], %s502
        %s504 = sand.u32 %s115, 1
        %s505 = smul.addr %s504, 96
        %s506 = scalar_lea.vmem [#allocation2], %s505
        // Predicated region
        $region37: #{tpu_custom_call.1} parent=35 // pred_check
          %p507 = pneg %p125
        $region38: #{tpu_custom_call.1} parent=35 // pred_check_branch
          %509 = sbr.rel (%p507) target = $region40
        $region39: #{tpu_custom_call.1} parent=35 // pred_region
          %s510 = smul.u32 12, %s18
          %512 = vsyncadd %s503, 0
          %s513 = smul.addr %s510, 2
          %s514 = smul.addr %s513, 4
          %s515 = scalar_lea.hbm %s4, %s514
          %s516 = sshll.u32 %s506, 4
          %s517 = int_to_ptr.vmem [resolvable:$true] %s516
          %s518 = sshll.u32 %s515, 4
          %s519 = int_to_ptr.hbm [resolvable:$true] %s518
          %524 = dma.vmem_to_hbm [thread:$0]  %s517, 1536, %s519, %s503, 128, 128, 8
        $region40: #{tpu_custom_call.1} parent=35 // pred_fallthru
          _
      $region36: #{tpu_custom_call.1} parent=5 // pred_fallthru
        _
      %p525 = scmp.le.s32.totalorder 2, %s13
      // Predicated region
      $region41: #{tpu_custom_call.1} parent=5 // pred_check
        %p526 = pneg %p525
      $region42: #{tpu_custom_call.1} parent=5 // pred_check_branch
        %528 = sbr.rel (%p526) target = $region44
      $region43: #{tpu_custom_call.1} parent=5 // pred_region
        %s529 = ssub.s32 %s13, 2
        // Predicated region
        $region45: #{tpu_custom_call.1} parent=43 // pred_check
          %p530 = pneg %p131
        $region46: #{tpu_custom_call.1} parent=43 // pred_check_branch
          %532 = sbr.rel (%p530) target = $region48
        $region47: #{tpu_custom_call.1} parent=43 // pred_region
          %s533 = sand.u32 %s116, 1
          %s534 = scalar_lea.sflag [#allocation3], %s533
          %s535 = sand.u32 %s116, 1
          %s536 = smul.addr %s535, 96
          %s537 = scalar_lea.vmem [#allocation2], %s536
          %539 = dma.done %s534, 1536
        $region48: #{tpu_custom_call.1} parent=43 // pred_fallthru
          _
      $region44: #{tpu_custom_call.1} parent=5 // pred_fallthru
        _
    $region6: #{tpu_custom_call.1} parent=1 // loop_footer
      %s17 = sadd.s32 1, %s13
    $region7: #{tpu_custom_call.1} parent=1 // loop_footer_branch
      %12 = sbr.rel target = $region3
    $region8: #{tpu_custom_call.1} parent=1 // loop_exit
      _
    %540 = vsyncpa [#allocation3], 1
    %s541 = scalar_lea.sflag [#allocation3], 1
    %542 = vsyncpa %s541, 1

</llo_original>
